<compile_context>
chip_gen: v6e
topology: v6e:2x2x1
jax: 0.10.0
libtpu: 0.0.40
codegen_flags: <defaults>
</compile_context>

<pallas_src>
import functools

import jax
import jax.numpy as jnp
from jax.experimental import pallas as pl
from jax.experimental.pallas import tpu as pltpu

_EPS = 1e-5


def _default_vmem_limit():
    """Generation-aware VMEM cap: ~3/4 of physical VMEM, never above 100 MiB,
    conservative 48 MiB fallback (safe on v7x's 64 MiB VMEM)."""
    try:
        cap = int(pltpu.get_tpu_info().vmem_capacity_bytes)
        return min((cap * 3) // 4, 100 * 1024 * 1024)
    except Exception:
        return 48 * 1024 * 1024


_VMEM_LIMIT = _default_vmem_limit()


def _row_align(compute_dtype):
    # bf16 packs 16 rows per sublane pair: keep row tiles 16-aligned for bf16.
    return 16 if jnp.dtype(compute_dtype).itemsize <= 2 else 8


def _pick_tile(n, target, align):
    """Largest divisor of n that is <= target and a multiple of `align`;
    falls back to the full dim (always a legal block size)."""
    if n <= target:
        return n
    t = (target // align) * align
    while t >= align:
        if n % t == 0:
            return t
        t -= align
    return n


def _pick_group(heads, d_head, target=512):
    """Largest divisor G of `heads` with G*d_head <= target.  Head groups give
    G*d-wide projection tiles (MXU fill + lane-dense stores) and a G*d
    contraction in to_out."""
    g = 1
    for cand in range(1, heads + 1):
        if heads % cand == 0 and cand * d_head <= target:
            g = cand
    return g


# ----------------------------- Pallas kernels ------------------------------ #

def _ln_group_proj_kernel(x_ref, g_ref, b_ref, w_ref, o_ref, xn_ref, *,
                          compute_dtype):
    """LayerNorm the row tile once (at head-group 0), then project it onto one
    head-group's weight.  grid = (B, S//tm, n_groups)."""
    gi = pl.program_id(2)

    @pl.when(gi == 0)
    def _():
        x = x_ref[0].astype(jnp.float32)                       # (tm, D)
        mu = jnp.mean(x, axis=-1, keepdims=True)
        var = jnp.mean(jnp.square(x - mu), axis=-1, keepdims=True)
        xh = (x - mu) * jax.lax.rsqrt(var + _EPS)
        xn_ref[...] = (xh * g_ref[...] + b_ref[...]).astype(compute_dtype)

    o_ref[0, 0] = jnp.dot(xn_ref[...], w_ref[0],
                          preferred_element_type=jnp.float32).astype(o_ref.dtype)


def _group_proj_kernel(x_ref, w_ref, o_ref, *, compute_dtype):
    """Plain head-group projection (no LayerNorm, no scratch round-trip);
    used for the cross-attention K/V projection of the external context."""
    o_ref[0, 0] = jnp.dot(x_ref[0].astype(compute_dtype), w_ref[0],
                          preferred_element_type=jnp.float32).astype(o_ref.dtype)


def _flash_attn_kernel(q_ref, k_ref, v_ref, o_ref, qs_ref, m_ref, l_ref,
                       acc_ref, *, scale, group, d_head, compute_dtype):
    """Online-softmax attention for one (batch, head-group, q-tile); grid axis
    3 is the KV-tile reduction axis.  The G heads of the group are unrolled
    statically inside the kernel."""
    ki = pl.program_id(3)

    @pl.when(ki == 0)
    def _():
        # cache a pre-scaled q once per q-tile (folds `scale`, removes the
        # per-KV-step scale multiply and casts)
        qs_ref[...] = (q_ref[0, 0].astype(jnp.float32) * scale).astype(compute_dtype)
        m_ref[...] = jnp.full(m_ref.shape, -jnp.inf, jnp.float32)
        l_ref[...] = jnp.zeros_like(l_ref)
        acc_ref[...] = jnp.zeros_like(acc_ref)

    qs = qs_ref[...]                                           # (tq, G*d)
    k = k_ref[0, 0]                                            # (tk, G*d)
    v = v_ref[0, 0]                                            # (tk, G*d)

    for g in range(group):                                     # static unroll
        sl = slice(g * d_head, (g + 1) * d_head)
        # compute_dtype (bf16) MXU operands, f32 accumulation; no k.T
        s = jax.lax.dot_general(qs[:, sl], k[:, sl], (((1,), (1,)), ((), ())),
                                preferred_element_type=jnp.float32)
        m_prev = m_ref[g]
        m_new = jnp.maximum(m_prev, jnp.max(s, axis=-1, keepdims=True))
        alpha = jnp.exp(m_prev - m_new)
        p = jnp.exp(s - m_new)
        l_ref[g] = alpha * l_ref[g] + jnp.sum(p, axis=-1, keepdims=True)
        acc_ref[g] = alpha * acc_ref[g] + jnp.dot(
            p.astype(compute_dtype), v[:, sl], preferred_element_type=jnp.float32)
        m_ref[g] = m_new

    @pl.when(ki == pl.num_programs(3) - 1)
    def _():
        parts = [acc_ref[g] * pl.reciprocal(l_ref[g], approx=True)
                 for g in range(group)]
        o_ref[0, 0] = jnp.concatenate(parts, axis=-1).astype(o_ref.dtype)


def _group_out_proj_kernel(a_ref, w_ref, b_ref, r_ref, o_ref, acc_ref):
    """to_out projection: reduce over head-groups (grid axis 3, K = G*d per
    step), fuse bias + residual at the end."""
    hg = pl.program_id(3)

    @pl.when(hg == 0)
    def _():
        acc_ref[...] = jnp.zeros_like(acc_ref)

    acc_ref[...] += jnp.dot(a_ref[0, 0], w_ref[0],
                            preferred_element_type=jnp.float32)

    @pl.when(hg == pl.num_programs(3) - 1)
    def _():
        o_ref[0] = (acc_ref[...] + b_ref[...] +
                    r_ref[0].astype(jnp.float32)).astype(o_ref.dtype)


def _ln_geglu_kernel(x_ref, g_ref, b_ref, w1a_ref, b1a_ref, w1b_ref, b1b_ref,
                     o_ref, xn_ref, *, compute_dtype):
    """LayerNorm fused with the GEGLU projection; W1 pre-split into value and
    gate halves so outputs stay lane-dense."""
    j = pl.program_id(1)

    @pl.when(j == 0)
    def _():
        x = x_ref[...].astype(jnp.float32)
        mu = jnp.mean(x, axis=-1, keepdims=True)
        var = jnp.mean(jnp.square(x - mu), axis=-1, keepdims=True)
        xh = (x - mu) * jax.lax.rsqrt(var + _EPS)
        xn_ref[...] = (xh * g_ref[...] + b_ref[...]).astype(compute_dtype)

    xn = xn_ref[...]
    a = jnp.dot(xn, w1a_ref[...], preferred_element_type=jnp.float32) + b1a_ref[...]
    g = jnp.dot(xn, w1b_ref[...], preferred_element_type=jnp.float32) + b1b_ref[...]
    o_ref[...] = (a * jax.nn.gelu(g, approximate=False)).astype(o_ref.dtype)


def _matmul_bias_res_kernel(x_ref, w_ref, b_ref, r_ref, o_ref, acc_ref):
    """K-tiled matmul with f32 accumulator; bias + residual fused at the end."""
    k = pl.program_id(2)

    @pl.when(k == 0)
    def _():
        acc_ref[...] = jnp.zeros_like(acc_ref)

    acc_ref[...] += jnp.dot(x_ref[...], w_ref[...],
                            preferred_element_type=jnp.float32)

    @pl.when(k == pl.num_programs(2) - 1)
    def _():
        o_ref[...] = (acc_ref[...] + b_ref[...] +
                      r_ref[...].astype(jnp.float32)).astype(o_ref.dtype)


# ----------------------------- pallas_call wrappers ------------------------ #

def ln_head_projection(x, gamma, beta, w_groups, *, compute_dtype, row_tile=512):
    """x: (B, S, D); w_groups: (NG, D, G*d) -> (B, NG, S, G*d) in compute_dtype."""
    B, S, D = x.shape
    NG, _, GD = w_groups.shape
    tm = _pick_tile(S, row_tile, _row_align(compute_dtype))
    w = w_groups.astype(compute_dtype)        # bf16 weight stream from HBM
    kernel = functools.partial(_ln_group_proj_kernel, compute_dtype=compute_dtype)
    return pl.pallas_call(
        kernel,
        out_shape=jax.ShapeDtypeStruct((B, NG, S, GD), compute_dtype),
        grid=(B, S // tm, NG),
        in_specs=[
            pl.BlockSpec((1, tm, D), lambda b, s, g: (b, s, 0)),
            pl.BlockSpec((1, D), lambda b, s, g: (0, 0)),
            pl.BlockSpec((1, D), lambda b, s, g: (0, 0)),
            pl.BlockSpec((1, D, GD), lambda b, s, g: (g, 0, 0)),
        ],
        out_specs=pl.BlockSpec((1, 1, tm, GD), lambda b, s, g: (b, g, s, 0)),
        scratch_shapes=[pltpu.VMEM((tm, D), compute_dtype)],
        compiler_params=pltpu.CompilerParams(
            dimension_semantics=("parallel", "parallel", "arbitrary"),
            vmem_limit_bytes=_VMEM_LIMIT),
    )(x, gamma, beta, w)


def head_projection(x, w_groups, *, compute_dtype, row_tile=512):
    """Head-group projection without LayerNorm (no xn scratch round-trip)."""
    B, S, D = x.shape
    NG, _, GD = w_groups.shape
    tm = _pick_tile(S, row_tile, _row_align(compute_dtype))
    w = w_groups.astype(compute_dtype)
    kernel = functools.partial(_group_proj_kernel, compute_dtype=compute_dtype)
    return pl.pallas_call(
        kernel,
        out_shape=jax.ShapeDtypeStruct((B, NG, S, GD), compute_dtype),
        grid=(B, S // tm, NG),
        in_specs=[
            pl.BlockSpec((1, tm, D), lambda b, s, g: (b, s, 0)),
            pl.BlockSpec((1, D, GD), lambda b, s, g: (g, 0, 0)),
        ],
        out_specs=pl.BlockSpec((1, 1, tm, GD), lambda b, s, g: (b, g, s, 0)),
        compiler_params=pltpu.CompilerParams(
            dimension_semantics=("parallel", "parallel", "parallel"),
            vmem_limit_bytes=_VMEM_LIMIT),
    )(x, w)


def flash_attention(q_arr, kv_arr, q_groups, group, d_head, scale, *, k_off,
                    v_off, compute_dtype, q_tile=512, kv_tile=512):
    """q_arr: (B, >=q_groups, Nq, G*d); kv_arr: (B, *, Nk, G*d).  K/V head
    groups are addressed via k_off / v_off offsets in the index_maps."""
    B, _, Nq, GD = q_arr.shape
    Nk = kv_arr.shape[2]
    align = _row_align(compute_dtype)
    tq = _pick_tile(Nq, q_tile, align)
    tk = _pick_tile(Nk, kv_tile, align)
    kernel = functools.partial(_flash_attn_kernel, scale=scale, group=group,
                               d_head=d_head, compute_dtype=compute_dtype)
    return pl.pallas_call(
        kernel,
        out_shape=jax.ShapeDtypeStruct((B, q_groups, Nq, GD), compute_dtype),
        grid=(B, q_groups, Nq // tq, Nk // tk),
        in_specs=[
            pl.BlockSpec((1, 1, tq, GD), lambda b, h, qi, ki: (b, h, qi, 0)),
            pl.BlockSpec((1, 1, tk, GD), lambda b, h, qi, ki: (b, h + k_off, ki, 0)),
            pl.BlockSpec((1, 1, tk, GD), lambda b, h, qi, ki: (b, h + v_off, ki, 0)),
        ],
        out_specs=pl.BlockSpec((1, 1, tq, GD), lambda b, h, qi, ki: (b, h, qi, 0)),
        scratch_shapes=[pltpu.VMEM((tq, GD), compute_dtype),        # scaled q
                        pltpu.VMEM((group, tq, 1), jnp.float32),    # m
                        pltpu.VMEM((group, tq, 1), jnp.float32),    # l
                        pltpu.VMEM((group, tq, d_head), jnp.float32)],  # acc
        compiler_params=pltpu.CompilerParams(
            dimension_semantics=("parallel", "parallel", "parallel", "arbitrary"),
            vmem_limit_bytes=_VMEM_LIMIT),
    )(q_arr, kv_arr, kv_arr)


def head_out_projection(attn, w_groups, bias, residual, *, compute_dtype,
                        row_tile=512, col_tile=256):
    """attn: (B, GH, N, G*d); w_groups: (GH, G*d, D); residual: (B, N, D)."""
    B, GH, N, GD = attn.shape
    D = w_groups.shape[2]
    tm = _pick_tile(N, row_tile, _row_align(compute_dtype))
    tn = _pick_tile(D, col_tile, 128)
    w = w_groups.astype(compute_dtype)
    return pl.pallas_call(
        _group_out_proj_kernel,
        out_shape=jax.ShapeDtypeStruct((B, N, D), residual.dtype),
        grid=(B, N // tm, D // tn, GH),
        in_specs=[
            pl.BlockSpec((1, 1, tm, GD), lambda b, ni, j, hg: (b, hg, ni, 0)),
            pl.BlockSpec((1, GD, tn), lambda b, ni, j, hg: (hg, 0, j)),
            pl.BlockSpec((1, tn), lambda b, ni, j, hg: (0, j)),
            pl.BlockSpec((1, tm, tn), lambda b, ni, j, hg: (b, ni, j)),
        ],
        out_specs=pl.BlockSpec((1, tm, tn), lambda b, ni, j, hg: (b, ni, j)),
        scratch_shapes=[pltpu.VMEM((tm, tn), jnp.float32)],
        compiler_params=pltpu.CompilerParams(
            dimension_semantics=("parallel", "parallel", "parallel", "arbitrary"),
            vmem_limit_bytes=_VMEM_LIMIT),
    )(attn, w, bias, residual)


def ln_geglu(x2d, gamma, beta, w1a, b1a, w1b, b1b, *, compute_dtype,
             row_tile=512, col_tile=512):
    R, D = x2d.shape
    F = w1a.shape[1]
    tm = _pick_tile(R, row_tile, _row_align(compute_dtype))
    tn = _pick_tile(F, col_tile, 128)
    w1a = w1a.astype(compute_dtype)
    w1b = w1b.astype(compute_dtype)
    kernel = functools.partial(_ln_geglu_kernel, compute_dtype=compute_dtype)
    return pl.pallas_call(
        kernel,
        out_shape=jax.ShapeDtypeStruct((R, F), compute_dtype),
        grid=(R // tm, F // tn),
        in_specs=[
            pl.BlockSpec((tm, D), lambda i, j: (i, 0)),
            pl.BlockSpec((1, D), lambda i, j: (0, 0)),
            pl.BlockSpec((1, D), lambda i, j: (0, 0)),
            pl.BlockSpec((D, tn), lambda i, j: (0, j)),
            pl.BlockSpec((1, tn), lambda i, j: (0, j)),
            pl.BlockSpec((D, tn), lambda i, j: (0, j)),
            pl.BlockSpec((1, tn), lambda i, j: (0, j)),
        ],
        out_specs=pl.BlockSpec((tm, tn), lambda i, j: (i, j)),
        scratch_shapes=[pltpu.VMEM((tm, D), compute_dtype)],
        compiler_params=pltpu.CompilerParams(
            dimension_semantics=("parallel", "arbitrary"),
            vmem_limit_bytes=_VMEM_LIMIT),
    )(x2d, gamma, beta, w1a, b1a, w1b, b1b)


def matmul_bias_residual(x2d, w, bias, res2d, *, compute_dtype,
                         row_tile=512, col_tile=256, k_tile=1024):
    R, K = x2d.shape
    D = w.shape[1]
    tm = _pick_tile(R, row_tile, _row_align(compute_dtype))
    tn = _pick_tile(D, col_tile, 128)
    tk = _pick_tile(K, k_tile, 128)
    w = w.astype(compute_dtype)
    return pl.pallas_call(
        _matmul_bias_res_kernel,
        out_shape=jax.ShapeDtypeStruct((R, D), res2d.dtype),
        grid=(R // tm, D // tn, K // tk),
        in_specs=[
            pl.BlockSpec((tm, tk), lambda i, j, k: (i, k)),
            pl.BlockSpec((tk, tn), lambda i, j, k: (k, j)),
            pl.BlockSpec((1, tn), lambda i, j, k: (0, j)),
            pl.BlockSpec((tm, tn), lambda i, j, k: (i, j)),
        ],
        out_specs=pl.BlockSpec((tm, tn), lambda i, j, k: (i, j)),
        scratch_shapes=[pltpu.VMEM((tm, tn), jnp.float32)],
        compiler_params=pltpu.CompilerParams(
            dimension_semantics=("parallel", "parallel", "arbitrary"),
            vmem_limit_bytes=_VMEM_LIMIT),
    )(x2d, w, bias, res2d)


# ----------------------------- module glue --------------------------------- #

def cross_attention_block(x, context, p, heads, d_head, group, ln_g, ln_b, *,
                          compute_dtype, self_attn):
    scale = d_head ** -0.5
    gh = heads // group
    if self_attn:
        # one fused LN + packed QKV projection -> (B, 3*gh, N, G*d)
        qkv = ln_head_projection(x, ln_g, ln_b, p["w_qkv"],
                                 compute_dtype=compute_dtype)
        attn = flash_attention(qkv, qkv, gh, group, d_head, scale,
                               k_off=gh, v_off=2 * gh,
                               compute_dtype=compute_dtype)
    else:
        q = ln_head_projection(x, ln_g, ln_b, p["w_q"],
                               compute_dtype=compute_dtype)
        kv = head_projection(context, p["w_kv"], compute_dtype=compute_dtype)
        attn = flash_attention(q, kv, gh, group, d_head, scale,
                               k_off=0, v_off=gh,
                               compute_dtype=compute_dtype)
    # to_out (bias) fused with the residual add; head-groups reduced in-kernel
    return head_out_projection(attn, p["w_o"], p["b_o"], x,
                               compute_dtype=compute_dtype)


def feed_forward_block(x, p, ln_g, ln_b, *, compute_dtype):
    B, N, D = x.shape
    x2d = x.reshape(B * N, D)
    h = ln_geglu(x2d, ln_g, ln_b, p["w1a"], p["b1a"], p["w1b"], p["b1b"],
                 compute_dtype=compute_dtype)
    out = matmul_bias_residual(h, p["w2"], p["b2"], x2d,
                               compute_dtype=compute_dtype)
    return out.reshape(B, N, D)


def basic_transformer_block(x, context, P, heads, d_head, group, *,
                            compute_dtype=jnp.float32):
    # attn1: self-attention (disable_self_attn=False)
    x = cross_attention_block(x, x, P["attn1"], heads, d_head, group,
                              P["ln1_g"], P["ln1_b"],
                              compute_dtype=compute_dtype, self_attn=True)
    # attn2: cross-attention with external context
    x = cross_attention_block(x, context, P["attn2"], heads, d_head, group,
                              P["ln2_g"], P["ln2_b"],
                              compute_dtype=compute_dtype, self_attn=False)
    # gated feed-forward (GEGLU)
    x = feed_forward_block(x, P["ff"], P["ln3_g"], P["ln3_b"],
                           compute_dtype=compute_dtype)
    return x


# ----------------------------- reference (pure JAX) ------------------------ #

def _heads_to_flat(w):  # (n_groups, Din, G*d) -> (Din, n_groups*G*d) = (Din, H*d)
    ng, Din, gd = w.shape
    return jnp.transpose(w, (1, 0, 2)).reshape(Din, ng * gd)


def _ref_block(x, context, P, heads, d_head):
    def ln(t, g, b):
        mu = t.mean(-1, keepdims=True)
        var = ((t - mu) ** 2).mean(-1, keepdims=True)
        return (t - mu) / jnp.sqrt(var + _EPS) * g[0] + b[0]

    def attn(xq, ctx, wq, wk, wv, wo, bo):
        q = xq @ wq
        k = ctx @ wk
        v = ctx @ wv
        B, N, _ = q.shape
        M = k.shape[1]
        qh = q.reshape(B, N, heads, d_head).transpose(0, 2, 1, 3)
        kh = k.reshape(B, M, heads, d_head).transpose(0, 2, 1, 3)
        vh = v.reshape(B, M, heads, d_head).transpose(0, 2, 1, 3)
        sim = jnp.einsum("bhnd,bhmd->bhnm", qh, kh) * (d_head ** -0.5)
        pa = jax.nn.softmax(sim, axis=-1)
        o = jnp.einsum("bhnm,bhmd->bhnd", pa, vh).transpose(0, 2, 1, 3)
        o = o.reshape(B, N, -1)
        return o @ wo + bo[0]

    dim = x.shape[-1]
    p1, p2, pf = P["attn1"], P["attn2"], P["ff"]
    gq = p1["w_qkv"].shape[0] // 3
    h1 = ln(x, P["ln1_g"], P["ln1_b"])
    x = attn(h1, h1,
             _heads_to_flat(p1["w_qkv"][:gq]),
             _heads_to_flat(p1["w_qkv"][gq:2 * gq]),
             _heads_to_flat(p1["w_qkv"][2 * gq:]),
             p1["w_o"].reshape(-1, dim), p1["b_o"]) + x
    h2 = ln(x, P["ln2_g"], P["ln2_b"])
    gk = p2["w_kv"].shape[0] // 2
    x = attn(h2, context,
             _heads_to_flat(p2["w_q"]),
             _heads_to_flat(p2["w_kv"][:gk]),
             _heads_to_flat(p2["w_kv"][gk:]),
             p2["w_o"].reshape(-1, dim), p2["b_o"]) + x
    h3 = ln(x, P["ln3_g"], P["ln3_b"])
    a = h3 @ pf["w1a"] + pf["b1a"][0]
    g = h3 @ pf["w1b"] + pf["b1b"][0]
    x = (a * jax.nn.gelu(g, approximate=False)) @ pf["w2"] + pf["b2"][0] + x
    return x


# ----------------------------- parameter init ------------------------------ #

def _init_params(key, dim, context_dim, heads, d_head, group, ff_mult=4):
    F = dim * ff_mult
    gh = heads // group
    gd = group * d_head
    ks = jax.random.split(key, 8)
    s = 0.05

    def w(k, shape):
        return jax.random.normal(k, shape, jnp.float32) * s

    return {
        "attn1": {
            "w_qkv": w(ks[0], (3 * gh, dim, gd)),   # packed q|k|v, group-major
            "w_o": w(ks[1], (gh, gd, dim)),         # to_out[0], group-major
            "b_o": jnp.zeros((1, dim), jnp.float32),
        },
        "attn2": {
            "w_q": w(ks[2], (gh, dim, gd)),
            "w_kv": w(ks[3], (2 * gh, context_dim, gd)),
            "w_o": w(ks[4], (gh, gd, dim)),
            "b_o": jnp.zeros((1, dim), jnp.float32),
        },
        "ff": {
            "w1a": w(ks[5], (dim, F)),              # GEGLU value half
            "b1a": jnp.zeros((1, F), jnp.float32),
            "w1b": w(ks[6], (dim, F)),              # GEGLU gate half
            "b1b": jnp.zeros((1, F), jnp.float32),
            "w2": w(ks[7], (F, dim)),
            "b2": jnp.zeros((1, dim), jnp.float32),
        },
        "ln1_g": jnp.ones((1, dim), jnp.float32),
        "ln1_b": jnp.zeros((1, dim), jnp.float32),
        "ln2_g": jnp.ones((1, dim), jnp.float32),
        "ln2_b": jnp.zeros((1, dim), jnp.float32),
        "ln3_g": jnp.ones((1, dim), jnp.float32),
        "ln3_b": jnp.zeros((1, dim), jnp.float32),
    }


# ----------------------------- main ---------------------------------------- #

if __name__ == "__main__":
    B, N, M = 2, 16, 8
    dim, context_dim = 32, 32
    heads, d_head = 4, 8

    group = _pick_group(heads, d_head)

    key = jax.random.PRNGKey(0)
    kx, kc, kp = jax.random.split(key, 3)
    x = jax.random.normal(kx, (B, N, dim), jnp.float32)
    context = jax.random.normal(kc, (B, M, context_dim), jnp.float32)
    params = _init_params(kp, dim, context_dim, heads, d_head, group)

    ref = _ref_block(x, context, params, heads, d_head)

    # f32 MXU-operand path (precision check)
    out = basic_transformer_block(x, context, params, heads, d_head, group,
                                  compute_dtype=jnp.float32)
    out = jax.block_until_ready(out)
    assert out.shape == (B, N, dim)
    err = float(jnp.max(jnp.abs(out - ref)))
    assert err < 3e-2, f"fp32 max abs err {err}"

    # bf16 MXU-operand path (production setting; f32 accumulation everywhere)
    out_bf16 = basic_transformer_block(x, context, params, heads, d_head, group,
                                       compute_dtype=jnp.bfloat16)
    out_bf16 = jax.block_until_ready(out_bf16)
    err_bf16 = float(jnp.max(jnp.abs(out_bf16.astype(jnp.float32) - ref)))
    assert err_bf16 < 2e-1, f"bf16 max abs err {err_bf16}"

    print("KERNEL_OK")
</pallas_src>

<mosaic_0001>
module attributes {stable_mosaic.version = 11 : i64} {
  func.func @_ln_group_proj_kernel(%arg0: i32, %arg1: i32, %arg2: i32, %arg3: memref<1x16x32xf32, #tpu.memory_space<vmem>>, %arg4: memref<1x32xf32, #tpu.memory_space<vmem>>, %arg5: memref<1x32xf32, #tpu.memory_space<vmem>>, %arg6: memref<1x32x32xf32, #tpu.memory_space<vmem>>, %arg7: memref<1x1x16x32xf32, #tpu.memory_space<vmem>>, %arg8: memref<16x32xf32, #tpu.memory_space<vmem>>) attributes {dimension_semantics = [#tpu.dimension_semantics<parallel>, #tpu.dimension_semantics<parallel>, #tpu.dimension_semantics<arbitrary>], iteration_bounds = array<i64: 2, 1, 3>, scalar_prefetch = 0 : i64, scratch_operands = 1 : i64, tpu.core_type = #tpu.core_type<tc>, window_params = [{transform_indices = @transform_0, window_bounds = array<i64: 1, 16, 32>}, {pipeline_mode = #tpu.pipeline_mode<synchronous>, transform_indices = @transform_1, window_bounds = array<i64: 1, 32>}, {pipeline_mode = #tpu.pipeline_mode<synchronous>, transform_indices = @transform_2, window_bounds = array<i64: 1, 32>}, {transform_indices = @transform_3, window_bounds = array<i64: 1, 32, 32>}, {transform_indices = @transform_4, window_bounds = array<i64: 1, 1, 16, 32>}]} {
    %c0_i32 = arith.constant 0 : i32
    %0 = arith.cmpi eq, %arg2, %c0_i32 : i32
    %1 = arith.extui %0 : i1 to i32
    %c0_i32_0 = arith.constant 0 : i32
    %2 = arith.cmpi ne, %1, %c0_i32_0 : i32
    scf.if %2 {
      %c0_9 = arith.constant 0 : index
      %c0_10 = arith.constant 0 : index
      %c0_11 = arith.constant 0 : index
      %10 = vector.load %arg3[%c0_9, %c0_10, %c0_11] : memref<1x16x32xf32, #tpu.memory_space<vmem>>, vector<1x16x32xf32>
      %11 = vector.shape_cast %10 : vector<1x16x32xf32> to vector<16x32xf32>
      %cst_12 = arith.constant dense<0.000000e+00> : vector<16xf32>
      %12 = vector.multi_reduction <add>, %11, %cst_12 [1] : vector<16x32xf32> to vector<16xf32>
      %13 = vector.shape_cast %12 : vector<16xf32> to vector<16x1xf32>
      %cst_13 = arith.constant 3.200000e+01 : f32
      %14 = vector.broadcast %cst_13 : f32 to vector<16x1xf32>
      %15 = arith.divf %13, %14 : vector<16x1xf32>
      %16 = vector.broadcast %15 : vector<16x1xf32> to vector<16x32xf32>
      %17 = arith.subf %11, %16 : vector<16x32xf32>
      %18 = arith.mulf %17, %17 : vector<16x32xf32>
      %cst_14 = arith.constant dense<0.000000e+00> : vector<16xf32>
      %19 = vector.multi_reduction <add>, %18, %cst_14 [1] : vector<16x32xf32> to vector<16xf32>
      %20 = vector.shape_cast %19 : vector<16xf32> to vector<16x1xf32>
      %cst_15 = arith.constant 3.200000e+01 : f32
      %21 = vector.broadcast %cst_15 : f32 to vector<16x1xf32>
      %22 = arith.divf %20, %21 : vector<16x1xf32>
      %23 = vector.broadcast %15 : vector<16x1xf32> to vector<16x32xf32>
      %24 = arith.subf %11, %23 : vector<16x32xf32>
      %cst_16 = arith.constant 9.99999974E-6 : f32
      %25 = vector.broadcast %cst_16 : f32 to vector<16x1xf32>
      %26 = arith.addf %22, %25 : vector<16x1xf32>
      %27 = math.rsqrt %26 : vector<16x1xf32>
      %28 = vector.broadcast %27 : vector<16x1xf32> to vector<16x32xf32>
      %29 = arith.mulf %24, %28 : vector<16x32xf32>
      %c0_17 = arith.constant 0 : index
      %c0_18 = arith.constant 0 : index
      %30 = vector.load %arg4[%c0_17, %c0_18] : memref<1x32xf32, #tpu.memory_space<vmem>>, vector<1x32xf32>
      %31 = vector.broadcast %30 : vector<1x32xf32> to vector<16x32xf32>
      %32 = arith.mulf %29, %31 : vector<16x32xf32>
      %c0_19 = arith.constant 0 : index
      %c0_20 = arith.constant 0 : index
      %33 = vector.load %arg5[%c0_19, %c0_20] : memref<1x32xf32, #tpu.memory_space<vmem>>, vector<1x32xf32>
      %34 = vector.broadcast %33 : vector<1x32xf32> to vector<16x32xf32>
      %35 = arith.addf %32, %34 : vector<16x32xf32>
      %c0_21 = arith.constant 0 : index
      %c0_22 = arith.constant 0 : index
      %36 = vector.load %arg8[%c0_21, %c0_22] : memref<16x32xf32, #tpu.memory_space<vmem>>, vector<16x32xf32>
      tpu.vector_store %arg8[%c0_21, %c0_22], %35 {strides = array<i32>} : memref<16x32xf32, #tpu.memory_space<vmem>>, vector<16x32xf32>,
    } else {
    }
    %c0 = arith.constant 0 : index
    %c0_1 = arith.constant 0 : index
    %3 = vector.load %arg8[%c0, %c0_1] : memref<16x32xf32, #tpu.memory_space<vmem>>, vector<16x32xf32>
    %c0_2 = arith.constant 0 : index
    %c0_3 = arith.constant 0 : index
    %c0_4 = arith.constant 0 : index
    %4 = vector.load %arg6[%c0_2, %c0_3, %c0_4] : memref<1x32x32xf32, #tpu.memory_space<vmem>>, vector<1x32x32xf32>
    %5 = vector.shape_cast %4 : vector<1x32x32xf32> to vector<32x32xf32>
    %cst = arith.constant dense<0.000000e+00> : vector<16x32xf32>
    %6 = tpu.matmul %3, %5, %cst {dimension_numbers = #tpu.dot_dimension_numbers<[1], [0], [0], [1], [0, 0, 1, 1], [], []>} : vector<16x32xf32>, vector<32x32xf32>, vector<16x32xf32> -> vector<16x32xf32>
    %c0_5 = arith.constant 0 : index
    %c0_6 = arith.constant 0 : index
    %c0_7 = arith.constant 0 : index
    %c0_8 = arith.constant 0 : index
    %7 = vector.load %arg7[%c0_5, %c0_6, %c0_7, %c0_8] : memref<1x1x16x32xf32, #tpu.memory_space<vmem>>, vector<1x1x16x32xf32>
    %8 = vector.shape_cast %7 : vector<1x1x16x32xf32> to vector<16x32xf32>
    %9 = vector.shape_cast %6 : vector<16x32xf32> to vector<1x1x16x32xf32>
    tpu.vector_store %arg7[%c0_5, %c0_6, %c0_7, %c0_8], %9 {strides = array<i32>} : memref<1x1x16x32xf32, #tpu.memory_space<vmem>>, vector<1x1x16x32xf32>,
    return
  }
  func.func @transform_0(%arg0: i32, %arg1: i32, %arg2: i32) -> (i32, i32, i32) {
    %c0_i32 = arith.constant 0 : i32
    %c0_i32_0 = arith.constant 0 : i32
    return %arg0, %arg1, %c0_i32 : i32, i32, i32
  }
  func.func @transform_1(%arg0: i32, %arg1: i32, %arg2: i32) -> (i32, i32) {
    %c0_i32 = arith.constant 0 : i32
    %c0_i32_0 = arith.constant 0 : i32
    %c0_i32_1 = arith.constant 0 : i32
    return %c0_i32, %c0_i32_0 : i32, i32
  }
  func.func @transform_2(%arg0: i32, %arg1: i32, %arg2: i32) -> (i32, i32) {
    %c0_i32 = arith.constant 0 : i32
    %c0_i32_0 = arith.constant 0 : i32
    %c0_i32_1 = arith.constant 0 : i32
    return %c0_i32, %c0_i32_0 : i32, i32
  }
  func.func @transform_3(%arg0: i32, %arg1: i32, %arg2: i32) -> (i32, i32, i32) {
    %c0_i32 = arith.constant 0 : i32
    %c0_i32_0 = arith.constant 0 : i32
    %c0_i32_1 = arith.constant 0 : i32
    return %arg2, %c0_i32, %c0_i32_0 : i32, i32, i32
  }
  func.func @transform_4(%arg0: i32, %arg1: i32, %arg2: i32) -> (i32, i32, i32, i32) {
    %c0_i32 = arith.constant 0 : i32
    %c0_i32_0 = arith.constant 0 : i32
    return %arg0, %arg2, %arg1, %c0_i32 : i32, i32, i32, i32
  }
}

</mosaic_0001>

<llo_original>
// kernel: tpu_custom_call.1
$region0: #{tpu_custom_call.1}
  #allocation0 [shape = 'u32[]', space=smem, size = 0x4, offset = 0x4, fixed_abs, tag = 'smem constant byte address 0x4 - core index']
  #allocation1 [shape = 'u32[144,128]{1,0:T(1,128)}', space=vmem, size = 0x12000, scoped, tag = 'internal scratch']
  #allocation2 [shape = 'f32[16,32]{1,0:T(8,128)}', space=vmem, size = 0x2000, scoped, tag = 'scratch operand']
  %s0 = inlined_call_operand.hbm [shape: f32[2,16,32], index: 0, kind: input, shape index: {}]
  %s1 = inlined_call_operand.vmem [shape: f32[1,32], index: 1, kind: input, shape index: {}]
  %s2 = inlined_call_operand.vmem [shape: f32[1,32], index: 2, kind: input, shape index: {}]
  %s3 = inlined_call_operand.hbm [shape: f32[3,32,32], index: 3, kind: input, shape index: {}]
  %s4 = inlined_call_operand.hbm [shape: f32[2,3,16,32], index: 4, kind: output, shape index: {}]
  %s5 = sld [smem:[#allocation0]]
  $region61: #{tpu_custom_call.1} parent=0
    _
  %s7 = ssub.s32 1, %s5
  %s8 = scalar_select 0, %s7, %s5
  $region1: #{tpu_custom_call.1} parent=0
    #allocation3 [shape = 'u8[16384]{0}', space=vmem, size = 0x4000, scoped, tag = 'input window, operand 0']
    #allocation4 [shape = 's32[2]{0}', space=sflag, size = 0x8, scoped, tag = 'scoped memory for tpu_custom_call.1']
    #allocation5 [shape = 's32[2]{0}', space=sflag, size = 0x8, scoped, tag = 'scoped memory for tpu_custom_call.1']
    #allocation6 [shape = 'u8[32768]{0}', space=vmem, size = 0x8000, scoped, tag = 'input window, operand 3']
    #allocation7 [shape = 's32[2]{0}', space=sflag, size = 0x8, scoped, tag = 'scoped memory for tpu_custom_call.1']
    #allocation8 [shape = 'u8[16384]{0}', space=vmem, size = 0x4000, scoped, tag = 'output window, operand 0']
    %9 = vsyncpa [#allocation4], 0
    %s10 = scalar_lea.sflag [#allocation4], 1
    %11 = vsyncpa %s10, 0
    %12 = vsyncpa [#allocation7], 0
    %s13 = scalar_lea.sflag [#allocation7], 1
    %14 = vsyncpa %s13, 0
    %15 = vsyncpa [#allocation5], 0
    %s16 = scalar_lea.sflag [#allocation5], 1
    %17 = vsyncpa %s16, 0
    loop: start=0, step=1, limit=8
    $region2: #{tpu_custom_call.1} parent=1 // loop_pre_header
      _
    $region3: #{tpu_custom_call.1} parent=1 // loop_header
      %s19 = sphi 0, %s23
      %p20 = scmp.ge.s32.totalorder %s19, 8
      %s26 = sphi 0, %s45
      %s27 = sphi 0, %s41
      %s28 = sphi 0, %s37
      %s29 = sphi 0, %s26
      %s30 = sphi 0, %s27
      %s31 = sphi 0, %s28
      %s32 = sphi 0, %s29
      %s33 = sphi 0, %s30
      %s34 = sphi 0, %s31
      %s50 = sphi 0, %s52
      %s53 = sphi 0, %s50
      %s54 = sphi 0, %s53
      %s70 = sphi 0, %s54
      %s74 = sphi 0, %s74
      %s76 = sphi 0, %s74
      %s77 = sphi 0, %s76
      %s91 = sphi 0, %s77
      %s95 = sphi 0, %s95
      %s97 = sphi 0, %s95
      %s98 = sphi 0, %s97
      %s112 = sphi 0, %s98
      %s118 = sphi 0, %s120
      %s121 = sphi 0, %s118
      %s122 = sphi 0, %s121
      %s138 = sphi 0, %s122
      %s148 = sphi 0, %s150
      %s151 = sphi 0, %s148
      %s152 = sphi 0, %s151
      %s168 = sphi 0, %s152
    $region4: #{tpu_custom_call.1} parent=1 // loop_header_branch
      %22 = sbr.rel (%p20) target = $region8
    $region5: #{tpu_custom_call.1} parent=1 // loop_body
      %s24 = ssub.s32 %s19, 1
      %s25 = ssub.s32 %s19, 2
      %s35 = sadd.s32 1, %s28
      %p36 = scmp.ge.s32.totalorder %s35, 3
      %s37 = scalar_select %p36, 0, %s35
      %s38 = sadd.s32 1, %s27
      %s39 = scalar_select %p36, %s38, %s27
      %p40 = scmp.ge.s32.totalorder %s39, 1
      %s41 = scalar_select %p40, 0, %s39
      %s42 = sadd.s32 1, %s26
      %s43 = scalar_select %p40, %s42, %s26
      %p44 = scmp.ge.s32.totalorder %s43, 2
      %s45 = scalar_select %p44, 0, %s43
      %s46 = ssub.s32 %s26, %s45
      %s47 = ssub.s32 %s27, %s41
      %s48 = sor.u32 %s46, %s47
      %p49 = scmp.eq.s32.totalorder %s48, 0
      %s51 = sadd.s32 %s50, 1
      %s52 = scalar_select %p49, %s50, %s51
      %p55 = pneg %p49
      %p56 = scmp.eq.s32.totalorder %s19, 5
      %p57 = por %p55, %p56
      %p58 = scmp.ne.s32.totalorder %s50, %s53
      %p59 = scmp.eq.s32.totalorder %s19, 0
      %p60 = por %p58, %p59
      %p61 = scmp.ne.s32.totalorder %s50, %s53
      %p62 = scmp.eq.s32.totalorder %s24, 5
      %p63 = por %p61, %p62
      %p64 = scmp.ne.s32.totalorder %s53, %s54
      %p65 = scmp.eq.s32.totalorder %s24, 0
      %p66 = por %p64, %p65
      %p67 = scmp.ne.s32.totalorder %s53, %s54
      %p68 = scmp.eq.s32.totalorder %s25, 5
      %p69 = por %p67, %p68
      %p71 = scmp.ne.s32.totalorder %s54, %s70
      %p72 = scmp.eq.s32.totalorder %s25, 0
      %p73 = por %p71, %p72
      %s75 = sadd.s32 %s74, 1
      %p78 = scmp.eq.s32.totalorder %s19, 5
      %p79 = scmp.ne.s32.totalorder %s74, %s76
      %p80 = scmp.eq.s32.totalorder %s19, 0
      %p81 = por %p79, %p80
      %p82 = scmp.ne.s32.totalorder %s74, %s76
      %p83 = scmp.eq.s32.totalorder %s24, 5
      %p84 = por %p82, %p83
      %p85 = scmp.ne.s32.totalorder %s76, %s77
      %p86 = scmp.eq.s32.totalorder %s24, 0
      %p87 = por %p85, %p86
      %p88 = scmp.ne.s32.totalorder %s76, %s77
      %p89 = scmp.eq.s32.totalorder %s25, 5
      %p90 = por %p88, %p89
      %p92 = scmp.ne.s32.totalorder %s77, %s91
      %p93 = scmp.eq.s32.totalorder %s25, 0
      %p94 = por %p92, %p93
      %s96 = sadd.s32 %s95, 1
      %p99 = scmp.eq.s32.totalorder %s19, 5
      %p100 = scmp.ne.s32.totalorder %s95, %s97
      %p101 = scmp.eq.s32.totalorder %s19, 0
      %p102 = por %p100, %p101
      %p103 = scmp.ne.s32.totalorder %s95, %s97
      %p104 = scmp.eq.s32.totalorder %s24, 5
      %p105 = por %p103, %p104
      %p106 = scmp.ne.s32.totalorder %s97, %s98
      %p107 = scmp.eq.s32.totalorder %s24, 0
      %p108 = por %p106, %p107
      %p109 = scmp.ne.s32.totalorder %s97, %s98
      %p110 = scmp.eq.s32.totalorder %s25, 5
      %p111 = por %p109, %p110
      %p113 = scmp.ne.s32.totalorder %s98, %s112
      %p114 = scmp.eq.s32.totalorder %s25, 0
      %p115 = por %p113, %p114
      %s116 = ssub.s32 %s28, %s37
      %p117 = scmp.eq.s32.totalorder %s116, 0
      %s119 = sadd.s32 %s118, 1
      %s120 = scalar_select %p117, %s118, %s119
      %p123 = pneg %p117
      %p124 = scmp.eq.s32.totalorder %s19, 5
      %p125 = por %p123, %p124
      %p126 = scmp.ne.s32.totalorder %s118, %s121
      %p127 = scmp.eq.s32.totalorder %s19, 0
      %p128 = por %p126, %p127
      %p129 = scmp.ne.s32.totalorder %s118, %s121
      %p130 = scmp.eq.s32.totalorder %s24, 5
      %p131 = por %p129, %p130
      %p132 = scmp.ne.s32.totalorder %s121, %s122
      %p133 = scmp.eq.s32.totalorder %s24, 0
      %p134 = por %p132, %p133
      %p135 = scmp.ne.s32.totalorder %s121, %s122
      %p136 = scmp.eq.s32.totalorder %s25, 5
      %p137 = por %p135, %p136
      %p139 = scmp.ne.s32.totalorder %s122, %s138
      %p140 = scmp.eq.s32.totalorder %s25, 0
      %p141 = por %p139, %p140
      %s142 = ssub.s32 %s26, %s45
      %s143 = ssub.s32 %s28, %s37
      %s144 = sor.u32 %s142, %s143
      %s145 = ssub.s32 %s27, %s41
      %s146 = sor.u32 %s144, %s145
      %p147 = scmp.eq.s32.totalorder %s146, 0
      %s149 = sadd.s32 %s148, 1
      %s150 = scalar_select %p147, %s148, %s149
      %p153 = pneg %p147
      %p154 = scmp.eq.s32.totalorder %s19, 5
      %p155 = por %p153, %p154
      %p156 = scmp.ne.s32.totalorder %s148, %s151
      %p157 = scmp.eq.s32.totalorder %s19, 0
      %p158 = por %p156, %p157
      %p159 = scmp.ne.s32.totalorder %s148, %s151
      %p160 = scmp.eq.s32.totalorder %s24, 5
      %p161 = por %p159, %p160
      %p162 = scmp.ne.s32.totalorder %s151, %s152
      %p163 = scmp.eq.s32.totalorder %s24, 0
      %p164 = por %p162, %p163
      %p165 = scmp.ne.s32.totalorder %s151, %s152
      %p166 = scmp.eq.s32.totalorder %s25, 5
      %p167 = por %p165, %p166
      %p169 = scmp.ne.s32.totalorder %s152, %s168
      %p170 = scmp.eq.s32.totalorder %s25, 0
      %p171 = por %p169, %p170
      %p172 = scmp.le.s32.totalorder 1, %s19
      %p173 = scmp.lt.s32.totalorder %s19, 7
      %p174 = pnand %p172, %p173
      %p175 = pneg %p174
      // Predicated region
      $region9: #{tpu_custom_call.1} parent=5 // pred_check
        _
      $region10: #{tpu_custom_call.1} parent=5 // pred_check_branch
        %177 = sbr.rel (%p174) target = $region12
      $region11: #{tpu_custom_call.1} parent=5 // pred_region
        %s178 = ssub.s32 %s19, 1
        // Predicated region
        $region13: #{tpu_custom_call.1} parent=11 // pred_check
          %p179 = pneg %p87
        $region14: #{tpu_custom_call.1} parent=11 // pred_check_branch
          %181 = sbr.rel (%p179) target = $region16
        $region15: #{tpu_custom_call.1} parent=11 // pred_region
          _
        $region16: #{tpu_custom_call.1} parent=11 // pred_fallthru
          _
        // Predicated region
        $region17: #{tpu_custom_call.1} parent=11 // pred_check
          %p182 = pneg %p108
        $region18: #{tpu_custom_call.1} parent=11 // pred_check_branch
          %184 = sbr.rel (%p182) target = $region20
        $region19: #{tpu_custom_call.1} parent=11 // pred_region
          _
        $region20: #{tpu_custom_call.1} parent=11 // pred_fallthru
          _
      $region12: #{tpu_custom_call.1} parent=5 // pred_fallthru
        _
      %p185 = scmp.lt.s32.totalorder %s19, 6
      // Predicated region
      $region21: #{tpu_custom_call.1} parent=5 // pred_check
        %p186 = pneg %p185
      $region22: #{tpu_custom_call.1} parent=5 // pred_check_branch
        %188 = sbr.rel (%p186) target = $region24
      $region23: #{tpu_custom_call.1} parent=5 // pred_region
        // Predicated region
        $region25: #{tpu_custom_call.1} parent=23 // pred_check
          %p189 = pneg %p60
        $region26: #{tpu_custom_call.1} parent=23 // pred_check_branch
          %191 = sbr.rel (%p189) target = $region28
        $region27: #{tpu_custom_call.1} parent=23 // pred_region
          %s192 = sand.u32 %s50, 1
          %s193 = scalar_lea.sflag [#allocation4], %s192
          %s194 = sand.u32 %s50, 1
          %s195 = smul.addr %s194, 16
          %s196 = scalar_lea.vmem [#allocation3], %s195
          %s197 = smul.u32 2, %s27
          %s199 = ssub.s32 256, 256
          %200 = vsyncadd %s193, %s199
          %s201 = smul.addr %s26, 2
          %s202 = sadd.s32 %s197, %s201
          %s203 = smul.addr %s202, 128
          %s204 = scalar_lea.hbm %s0, %s203
          %s205 = sshll.u32 %s196, 4
          %s206 = int_to_ptr.vmem [resolvable:$true] %s205
          %211 = dma.hbm_to_vmem [thread:$0]  %s204, 256, %s206, %s193, 128, 128, 8
        $region28: #{tpu_custom_call.1} parent=23 // pred_fallthru
          _
        // Predicated region
        $region29: #{tpu_custom_call.1} parent=23 // pred_check
          %p212 = pneg %p128
        $region30: #{tpu_custom_call.1} parent=23 // pred_check_branch
          %214 = sbr.rel (%p212) target = $region32
        $region31: #{tpu_custom_call.1} parent=23 // pred_region
          %s215 = sand.u32 %s118, 1
          %s216 = scalar_lea.sflag [#allocation7], %s215
          %s217 = sand.u32 %s118, 1
          %s218 = smul.addr %s217, 32
          %s219 = scalar_lea.vmem [#allocation6], %s218
          %s221 = ssub.s32 512, 512
          %222 = vsyncadd %s216, %s221
          %s223 = smul.addr %s28, 4
          %s224 = smul.addr %s223, 128
          %s225 = scalar_lea.hbm %s3, %s224
          %s226 = sshll.u32 %s219, 4
          %s227 = int_to_ptr.vmem [resolvable:$true] %s226
          %232 = dma.hbm_to_vmem [thread:$0]  %s225, 512, %s227, %s216, 128, 128, 8
        $region32: #{tpu_custom_call.1} parent=23 // pred_fallthru
          _
      $region24: #{tpu_custom_call.1} parent=5 // pred_fallthru
        _
      %p233 = scmp.le.s32.totalorder 1, %s19
      %p234 = scmp.lt.s32.totalorder %s19, 7
      %p235 = pnand %p233, %p234
      %p236 = pneg %p235
      // Predicated region
      $region33: #{tpu_custom_call.1} parent=5 // pred_check
        _
      $region34: #{tpu_custom_call.1} parent=5 // pred_check_branch
        %238 = sbr.rel (%p235) target = $region36
      $region35: #{tpu_custom_call.1} parent=5 // pred_region
        %s239 = ssub.s32 %s19, 1
        %s240 = sand.u32 %s53, 1
        %s241 = scalar_lea.sflag [#allocation4], %s240
        %s242 = sand.u32 %s53, 1
        %s243 = smul.addr %s242, 16
        %s244 = scalar_lea.vmem [#allocation3], %s243
        // Predicated region
        $region37: #{tpu_custom_call.1} parent=35 // pred_check
          %p245 = pneg %p66
        $region38: #{tpu_custom_call.1} parent=35 // pred_check_branch
          %247 = sbr.rel (%p245) target = $region40
        $region39: #{tpu_custom_call.1} parent=35 // pred_region
          %248 = dma.done %s241, 256
        $region40: #{tpu_custom_call.1} parent=35 // pred_fallthru
          _
        %s249 = sand.u32 %s121, 1
        %s250 = scalar_lea.sflag [#allocation7], %s249
        %s251 = sand.u32 %s121, 1
        %s252 = smul.addr %s251, 32
        %s253 = scalar_lea.vmem [#allocation6], %s252
        // Predicated region
        $region41: #{tpu_custom_call.1} parent=35 // pred_check
          %p254 = pneg %p134
        $region42: #{tpu_custom_call.1} parent=35 // pred_check_branch
          %256 = sbr.rel (%p254) target = $region44
        $region43: #{tpu_custom_call.1} parent=35 // pred_region
          %257 = dma.done %s250, 512
        $region44: #{tpu_custom_call.1} parent=35 // pred_fallthru
          _
        %s258 = sand.u32 %s53, 1
        %s259 = scalar_lea.sflag [#allocation4], %s258
        %s260 = sand.u32 %s53, 1
        %s261 = smul.addr %s260, 16
        %s262 = scalar_lea.vmem [#allocation3], %s261
        %p263 = pneg %p66
        %p264 = pneg %p63
        %p265 = pneg %p87
        %p266 = pneg %p84
        %p267 = pneg %p108
        %p268 = pneg %p105
        %s269 = sand.u32 %s121, 1
        %s270 = scalar_lea.sflag [#allocation7], %s269
        %s271 = sand.u32 %s121, 1
        %s272 = smul.addr %s271, 32
        %s273 = scalar_lea.vmem [#allocation6], %s272
        %p274 = pneg %p134
        %p275 = pneg %p131
        %p276 = pneg %p164
        %p277 = pneg %p161
        %s278 = sand.u32 %s151, 1
        %s279 = scalar_lea.sflag [#allocation5], %s278
        %s280 = sand.u32 %s151, 1
        %s281 = smul.addr %s280, 16
        %s282 = scalar_lea.vmem [#allocation8], %s281
        %s283 = smul.u32 2, %s30
        %s284 = smul.u32 2, %s30
        %p285 = scmp.eq.s32.totalorder %s31, 0
        // Predicated region
        $region45: #{tpu_custom_call.1} parent=35 // pred_check
          %p286 = pneg %p285
        $region46: #{tpu_custom_call.1} parent=35 // pred_check_branch
          %288 = sbr.rel (%p286) target = $region48
        $region47: #{tpu_custom_call.1} parent=35 // pred_region
          %v289 = vld [vmem:[%s244] sm:$0xff]
          %v290 = vld [vmem:[%s244 + $0x8] sm:$0xff]
          %vm291 = vcmask 261120
          %v292 = vsel %vm291, %v289, 0.0
          %293 = vadd.xlane.f32.xlu0 %v292
          %v294 = vpop.xlane.xlu0 %293
          %v295 = vsel %vm291, %v290, 0.0
          %296 = vadd.xlane.f32.xlu0 %v295
          %v297 = vpop.xlane.xlu0 %296
          %v298 = vrcp.pop 32.0
          %v299 = vmul.f32 %v294, %v298
          %v300 = vmul.f32 %v297, %v298
          %v301 = vsub.f32 %v289, %v299
          %v302 = vsub.f32 %v290, %v300
          %v303 = vmul.f32 %v301, %v301
          %v304 = vmul.f32 %v302, %v302
          %v305 = vsel %vm291, %v303, 0.0
          %306 = vadd.xlane.f32.xlu0 %v305
          %v307 = vpop.xlane.xlu0 %306
          %v308 = vsel %vm291, %v304, 0.0
          %309 = vadd.xlane.f32.xlu0 %v308
          %v310 = vpop.xlane.xlu0 %309
          %v311 = vmul.f32 %v307, %v298
          %v312 = vmul.f32 %v310, %v298
          %v313 = vadd.f32 %v311, 1e-05
          %v314 = vadd.f32 %v312, 1e-05
          %v315 = vrsqrt.pop %v313
          %v316 = vrsqrt.pop %v314
          %v317 = vmul.f32 %v301, %v315
          %v318 = vmul.f32 %v302, %v316
          %v319 = vld [vmem:[%s1] sm:$0x1]
          %v321 = vlaneseq
          %v322 = vshrl.u32 %v321, 7
          %v323 = vsub.s32 0, %v322
          %v324 = vrot.slane %v319, %v323
          %v326 = vmul.f32 %v317, %v324
          %v327 = vmul.f32 %v318, %v324
          %v328 = vld [vmem:[%s2] sm:$0x1]
          %v330 = vlaneseq
          %v331 = vshrl.u32 %v330, 7
          %v332 = vsub.s32 0, %v331
          %v333 = vrot.slane %v328, %v332
          %v335 = vadd.f32 %v326, %v333
          %v336 = vadd.f32 %v327, %v333
          %337 = vst.msk [vmem:[#allocation2] sm:$0xff] %vm291, %v335
          %338 = vst.msk [vmem:[#allocation2 + $0x8] sm:$0xff] %vm291, %v336
        $region48: #{tpu_custom_call.1} parent=35 // pred_fallthru
          _
        %v339 = vld [vmem:[#allocation2] sm:$0xff]
        %v340 = vld [vmem:[#allocation2 + $0x8] sm:$0xff]
        %v341 = vld [vmem:[%s253] sm:$0xff]
        %v342 = vld [vmem:[%s253 + $0x8] sm:$0xff]
        %v343 = vld [vmem:[%s253 + $0x10] sm:$0xff]
        %v344 = vld [vmem:[%s253 + $0x18] sm:$0xff]
        %vm345 = vcmask 261120
        %v347 = vsel %vm345, %v339, 0
        %v350 = vsel %vm345, %v340, 0
        %352 = vmatprep.subr.mxu0 0.0
        %353 = vmatpush1.msra.mxu0 0.0
        %354 = vmatprep.subr.mxu0 0.0
        %355 = vmatpush1.msra.mxu0 0.0
        %356 = vmatprep.subr.mxu0 0.0
        %357 = vmatpush1.msra.mxu0 0.0
        %358 = vmatprep.subr.mxu0 0.0
        %359 = vmatpush1.msra.mxu0 0.0
        %360 = vmatprep.subr.mxu0 0.0
        %361 = vmatpush1.msra.mxu0 0.0
        %362 = vmatprep.subr.mxu0 0.0
        %363 = vmatpush1.msra.mxu0 0.0
        %364 = vmatprep.subr.mxu0 0.0
        %365 = vmatpush1.msra.mxu0 0.0
        %366 = vmatprep.subr.mxu0 0.0
        %367 = vmatpush1.msra.mxu0 0.0
        %368 = vmatprep.subr.mxu0 0.0
        %369 = vmatpush1.msra.mxu0 0.0
        %370 = vmatprep.subr.mxu0 0.0
        %371 = vmatpush1.msra.mxu0 0.0
        %372 = vmatprep.subr.mxu0 0.0
        %373 = vmatpush1.msra.mxu0 0.0
        %374 = vmatprep.subr.mxu0 0.0
        %375 = vmatpush1.msra.mxu0 0.0
        %376 = vmatprep.subr.mxu0 0.0
        %377 = vmatpush1.msra.mxu0 %v344
        %378 = vmatprep.subr.mxu0 0.0
        %379 = vmatpush1.msra.mxu0 %v343
        %380 = vmatprep.subr.mxu0 0.0
        %381 = vmatpush1.msra.mxu0 %v342
        %382 = vmatprep.subr.mxu0 0.0
        %383 = vmatpush1.msra.mxu0 %v341
        %384 = vmatprep.subr.mxu0 0.0
        %385 = vmatpush2.msra.mxu0 0.0
        %386 = vmatprep.subr.mxu0 0.0
        %387 = vmatpush2.msra.mxu0 0.0
        %388 = vmatprep.subr.mxu0 0.0
        %389 = vmatpush2.msra.mxu0 0.0
        %390 = vmatprep.subr.mxu0 0.0
        %391 = vmatpush2.msra.mxu0 0.0
        %392 = vmatprep.subr.mxu0 0.0
        %393 = vmatpush2.msra.mxu0 0.0
        %394 = vmatprep.subr.mxu0 0.0
        %395 = vmatpush2.msra.mxu0 0.0
        %396 = vmatprep.subr.mxu0 0.0
        %397 = vmatpush2.msra.mxu0 0.0
        %398 = vmatprep.subr.mxu0 0.0
        %399 = vmatpush2.msra.mxu0 0.0
        %400 = vmatprep.subr.mxu0 0.0
        %401 = vmatpush2.msra.mxu0 0.0
        %402 = vmatprep.subr.mxu0 0.0
        %403 = vmatpush2.msra.mxu0 0.0
        %404 = vmatprep.subr.mxu0 0.0
        %405 = vmatpush2.msra.mxu0 0.0
        %406 = vmatprep.subr.mxu0 0.0
        %407 = vmatpush2.msra.mxu0 0.0
        %408 = vmatprep.subr.mxu0 0.0
        %409 = vmatpush2.msra.mxu0 0.0
        %410 = vmatprep.subr.mxu0 0.0
        %411 = vmatpush2.msra.mxu0 0.0
        %412 = vmatprep.subr.mxu0 0.0
        %413 = vmatpush2.msra.mxu0 0.0
        %414 = vmatprep.subr.mxu0 0.0
        %415 = vmatpush2.msra.mxu0 0.0
        %416 = vmatprep.mubr.f32.mxu0 0.0
        %417 = vmatmul.mubr.f32.gmra.mxu0 %v347
        %v418 = vpop.f32.mrf.mxu0
        %v419 = vadd.f32 0.0, %v418
        %v420 = vpop.f32.mrf.mxu0
        %421 = vmatprep.mubr.f32.mxu0 0.0
        %422 = vmatmul.mubr.f32.gmra.mxu0 %v350
        %v423 = vpop.f32.mrf.mxu0
        %v424 = vadd.f32 0.0, %v423
        %v425 = vpop.f32.mrf.mxu0
        %426 = vdwg.mxu0
        %427 = vst.msk [vmem:[%s282] sm:$0xff] %vm345, %v419
        %428 = vst.msk [vmem:[%s282 + $0x8] sm:$0xff] %vm345, %v424
        %s429 = sand.u32 %s151, 1
        %s430 = scalar_lea.sflag [#allocation5], %s429
        %s431 = sand.u32 %s151, 1
        %s432 = smul.addr %s431, 16
        %s433 = scalar_lea.vmem [#allocation8], %s432
        // Predicated region
        $region49: #{tpu_custom_call.1} parent=35 // pred_check
          %p434 = pneg %p161
        $region50: #{tpu_custom_call.1} parent=35 // pred_check_branch
          %436 = sbr.rel (%p434) target = $region52
        $region51: #{tpu_custom_call.1} parent=35 // pred_region
          %s437 = smul.u32 2, %s30
          %s439 = ssub.s32 256, 256
          %440 = vsyncadd %s430, %s439
          %s441 = smul.addr %s31, 2
          %s442 = sadd.s32 %s437, %s441
          %s443 = smul.addr %s29, 6
          %s444 = sadd.s32 %s442, %s443
          %s445 = smul.addr %s444, 128
          %s446 = scalar_lea.hbm %s4, %s445
          %s447 = sshll.u32 %s433, 4
          %s448 = int_to_ptr.vmem [resolvable:$true] %s447
          %453 = dma.vmem_to_hbm [thread:$0]  %s448, 256, %s446, %s430, 128, 128, 8
        $region52: #{tpu_custom_call.1} parent=35 // pred_fallthru
          _
      $region36: #{tpu_custom_call.1} parent=5 // pred_fallthru
        _
      %p454 = scmp.le.s32.totalorder 2, %s19
      // Predicated region
      $region53: #{tpu_custom_call.1} parent=5 // pred_check
        %p455 = pneg %p454
      $region54: #{tpu_custom_call.1} parent=5 // pred_check_branch
        %457 = sbr.rel (%p455) target = $region56
      $region55: #{tpu_custom_call.1} parent=5 // pred_region
        %s458 = ssub.s32 %s19, 2
        // Predicated region
        $region57: #{tpu_custom_call.1} parent=55 // pred_check
          %p459 = pneg %p167
        $region58: #{tpu_custom_call.1} parent=55 // pred_check_branch
          %461 = sbr.rel (%p459) target = $region60
        $region59: #{tpu_custom_call.1} parent=55 // pred_region
          %s462 = sand.u32 %s152, 1
          %s463 = scalar_lea.sflag [#allocation5], %s462
          %s464 = sand.u32 %s152, 1
          %s465 = smul.addr %s464, 16
          %s466 = scalar_lea.vmem [#allocation8], %s465
          %467 = dma.done %s463, 256
        $region60: #{tpu_custom_call.1} parent=55 // pred_fallthru
          _
      $region56: #{tpu_custom_call.1} parent=5 // pred_fallthru
        _
    $region6: #{tpu_custom_call.1} parent=1 // loop_footer
      %s23 = sadd.s32 1, %s19
    $region7: #{tpu_custom_call.1} parent=1 // loop_footer_branch
      %18 = sbr.rel target = $region3
    $region8: #{tpu_custom_call.1} parent=1 // loop_exit
      _
    %468 = vsyncpa [#allocation4], 1
    %s469 = scalar_lea.sflag [#allocation4], 1
    %470 = vsyncpa %s469, 1
    %471 = vsyncpa [#allocation7], 1
    %s472 = scalar_lea.sflag [#allocation7], 1
    %473 = vsyncpa %s472, 1
    %474 = vsyncpa [#allocation5], 1
    %s475 = scalar_lea.sflag [#allocation5], 1
    %476 = vsyncpa %s475, 1

</llo_original>
